<compile_context>
chip_gen: v7x
topology: tpu7x:2x2x1
jax: 0.10.0
libtpu: 0.0.40
codegen_flags: <defaults>
</compile_context>

<pallas_src>
import functools

import jax
import jax.numpy as jnp
from jax.experimental import pallas as pl
from jax.experimental.pallas import tpu as pltpu

_LANE = 128


def _sigmoid(x):
    # Single-EUP-op formulation (tanh) rather than exp + divide.
    half = jnp.asarray(0.5, x.dtype)
    return half * jnp.tanh(half * x) + half


def _pick_compute_dtype(in_dtype):
    """bf16 compute only for bf16 inputs on bf16-capable VPUs/EUPs (v6e/v7x)."""
    if jnp.dtype(in_dtype) != jnp.bfloat16:
        return jnp.float32
    try:
        kind = jax.devices()[0].device_kind.lower()
    except Exception:
        return jnp.float32
    if "v6" in kind or "v7" in kind:
        return jnp.bfloat16
    return jnp.float32  # v5e and older: no bf16 VPU/EUP -> upcast


def _tversky_partial_kernel(preds_ref, targets_ref, out_ref, acc_ref, *,
                            s_total, tile_s, tiles_per_split,
                            compute_dtype, mask_rows):
    # preds_ref:   (1, C, TS, 128) logits (input dtype)
    # targets_ref: (1, 1, TS, 128) integer labels (int8/int16/int32)
    # out_ref:     (1, 1, 2) f32 SMEM -> [tp, sum_p] for this (batch, split)
    # acc_ref:     (2, acc_s, 128) f32 running row partials (acc_s == 8 typ.)
    k = pl.program_id(2)

    @pl.when(k == 0)
    def _init():
        acc_ref[...] = jnp.zeros_like(acc_ref)

    x = preds_ref[...]
    if x.dtype != compute_dtype:
        x = x.astype(compute_dtype)
    p = _sigmoid(x)                                       # (1, C, TS, 128)
    t = targets_ref[...].astype(jnp.int32)                # (1, 1, TS, 128)
    C = p.shape[1]

    cls = jax.lax.broadcasted_iota(jnp.int32, (1, C, 1, 1), 1)
    is_cls = t == cls                                     # (1, C, TS, 128)

    if mask_rows:
        # Global 128-lane-row index of each sublane row of this tile.  Rows at
        # or past s_total come from a ragged edge block (or a clamped,
        # duplicated edge block) and must contribute nothing.
        blk = pl.program_id(1) * tiles_per_split + k
        row = jax.lax.broadcasted_iota(jnp.int32, (1, 1, tile_s, _LANE), 2)
        valid = (blk * tile_s + row) < s_total            # (1, 1, TS, 128)
        tp_tile = jnp.where(is_cls & valid, p, 0.0)
        p_sel = jnp.where(valid, p, 0.0)
    else:
        tp_tile = jnp.where(is_cls, p, 0.0)
        p_sel = p

    acc_s = acc_ref.shape[1]

    def fold(rows):
        # (TS, 128) compute-dtype row partials -> (acc_s, 128) f32.
        rows = rows.astype(jnp.float32)
        if tile_s == acc_s:
            return rows
        return jnp.sum(rows.reshape(tile_s // acc_s, acc_s, _LANE), axis=0)

    # Leading-axis reductions only (pure VPU vreg adds, no cross-lane traffic).
    acc_ref[0] += fold(jnp.sum(tp_tile, axis=(0, 1)))
    acc_ref[1] += fold(jnp.sum(p_sel, axis=(0, 1)))

    @pl.when(k == pl.num_programs(2) - 1)
    def _finalize():
        out_ref[0, 0, 0] = jnp.sum(acc_ref[0])
        out_ref[0, 0, 1] = jnp.sum(acc_ref[1])


def tversky_loss(preds, targets, alpha=0.7, beta=0.3, smooth=1e-6, *,
                 vmem_budget_bytes=24 * 1024 * 1024, max_tile_s=2048,
                 n_hw_splits=None, compute_dtype=None):
    """Pallas implementation of TverskyLoss.forward(preds, targets).

    preds:   (B, C, H, W) float logits (f32 or bf16)
    targets: (B, H, W)    integer class labels in [0, C)
    returns: scalar float32 loss
    """
    B, C, H, W = preds.shape
    HW = H * W
    S = pl.cdiv(HW, _LANE)                      # 128-lane rows per sample

    # ---- label dtype: keep narrow labels narrow (less HBM traffic) ---------
    if (jnp.issubdtype(targets.dtype, jnp.integer)
            and jnp.dtype(targets.dtype).itemsize <= 2):
        t_dtype = targets.dtype
    else:
        t_dtype = jnp.int32
    preds_r = preds.reshape(B, C, HW)
    targets_r = targets.reshape(B, 1, HW).astype(t_dtype)

    # Pad only the sub-128 lane remainder (no full-tensor pad when H*W is
    # already a multiple of 128).  Pad logits of -1e9 -> sigmoid == 0 and pad
    # labels match no class, so padding contributes nothing to tp / sum_p.
    pad = S * _LANE - HW
    if pad:
        if jnp.issubdtype(jnp.dtype(t_dtype), jnp.signedinteger):
            t_pad = -1
        else:
            t_pad = jnp.iinfo(t_dtype).max
        preds_r = jnp.pad(preds_r, ((0, 0), (0, 0), (0, pad)),
                          constant_values=-1e9)
        targets_r = jnp.pad(targets_r, ((0, 0), (0, 0), (0, pad)),
                            constant_values=t_pad)
    preds_r = preds_r.reshape(B, C, S, _LANE)
    targets_r = targets_r.reshape(B, 1, S, _LANE)

    # ---- tiling ------------------------------------------------------------
    if compute_dtype is None:
        compute_dtype = _pick_compute_dtype(preds.dtype)
    in_item = jnp.dtype(preds.dtype).itemsize
    t_item = jnp.dtype(t_dtype).itemsize
    c_item = jnp.dtype(compute_dtype).itemsize

    # Per 128-lane row: double-buffered preds + targets input blocks plus ~2
    # compute-dtype temporary planes (sigmoid output / selected plane).
    row_bytes = _LANE * (2 * C * in_item + 2 * t_item + 2 * C * c_item)
    tile_s = max(1, min(S, max_tile_s, vmem_budget_bytes // row_bytes))
    align = max(8, 32 // t_item)                # (8,128) tiles; (32,128) for i8
    if tile_s < S:
        tile_s = max(align, (tile_s // align) * align)
        tile_s = min(tile_s, S)
    num_tiles = pl.cdiv(S, tile_s)

    if n_hw_splits is None:
        # v7x has two TensorCores; when B alone can't keep both busy, split
        # the HW tile range as a second "parallel" grid axis.
        n_hw_splits = 2 if (B % 2 != 0 and num_tiles >= 2) else 1
    n_split = max(1, min(n_hw_splits, num_tiles))
    tiles_per_split = pl.cdiv(num_tiles, n_split)

    # In-kernel masking is needed whenever some grid step covers rows >= S
    # (ragged edge tile and/or clamped duplicate tile).
    mask_rows = (n_split * tiles_per_split * tile_s) > S
    need_clamp = (n_split * tiles_per_split) > num_tiles
    last_blk = num_tiles - 1

    def in_map(b, s, k):
        blk = s * tiles_per_split + k
        if need_clamp:
            blk = jnp.minimum(blk, last_blk)    # never issue a fully-OOB block
        return (b, 0, blk, 0)

    acc_s = 8 if tile_s % 8 == 0 else tile_s

    kernel = functools.partial(
        _tversky_partial_kernel,
        s_total=S, tile_s=tile_s, tiles_per_split=tiles_per_split,
        compute_dtype=compute_dtype, mask_rows=mask_rows)

    # Explicit scoped-VMEM limit: above v5e's 16 MiB default, below v7x's
    # 64 MiB physical per TensorCore.
    vmem_limit = int(min(48 << 20, max(32 << 20, vmem_budget_bytes + (8 << 20))))

    partials = pl.pallas_call(
        kernel,
        out_shape=jax.ShapeDtypeStruct((B, n_split, 2), jnp.float32),
        grid=(B, n_split, tiles_per_split),
        in_specs=[
            pl.BlockSpec((1, C, tile_s, _LANE), in_map),
            pl.BlockSpec((1, 1, tile_s, _LANE), in_map),
        ],
        out_specs=pl.BlockSpec((1, 1, 2), lambda b, s, k: (b, s, 0),
                               memory_space=pltpu.SMEM),
        scratch_shapes=[pltpu.VMEM((2, acc_s, _LANE), jnp.float32)],
        compiler_params=pltpu.CompilerParams(
            dimension_semantics=("parallel", "parallel", "arbitrary"),
            vmem_limit_bytes=vmem_limit,
        ),
    )(preds_r, targets_r)

    # ---- trivial Tversky glue in JAX ----------------------------------------
    tp = partials[:, :, 0].sum(axis=1)          # (B,)
    sum_p = partials[:, :, 1].sum(axis=1)       # (B,)
    # Every pixel has exactly one class in [0, C) (F.one_hot would raise
    # otherwise), so sum(onehot) == H*W:  fn = HW - tp,  fp = sum_p - tp.
    false_neg = float(HW) - tp
    false_pos = sum_p - tp
    tversky = (tp + smooth) / (tp + alpha * false_neg + beta * false_pos + smooth)
    return 1.0 - tversky.mean()


def tversky_loss_reference(preds, targets, alpha=0.7, beta=0.3, smooth=1e-6):
    """Pure-JAX reference mirroring the PyTorch module exactly."""
    p = jax.nn.sigmoid(preds.astype(jnp.float32))               # (B,C,H,W)
    C = p.shape[1]
    onehot = jax.nn.one_hot(targets, C, dtype=jnp.float32)      # (B,H,W,C)
    onehot = jnp.transpose(onehot, (0, 3, 1, 2))                # (B,C,H,W)
    tp = jnp.sum(p * onehot, axis=(1, 2, 3))
    fn = jnp.sum((1.0 - p) * onehot, axis=(1, 2, 3))
    fp = jnp.sum(p * (1.0 - onehot), axis=(1, 2, 3))
    tv = (tp + smooth) / (tp + alpha * fn + beta * fp + smooth)
    return 1.0 - tv.mean()


if __name__ == "__main__":
    key = jax.random.PRNGKey(0)
    k1, k2, k3, k4, k5, k6 = jax.random.split(key, 6)

    def check(name, preds, targets, **kw):
        out = jax.block_until_ready(tversky_loss(preds, targets, **kw))
        ref = jax.block_until_ready(tversky_loss_reference(preds, targets))
        assert jnp.allclose(out, ref, rtol=1e-4, atol=1e-5), (name, out, ref)

    # 1) Primary small case: single tile per sample, batch-parallel grid.
    preds = jax.random.normal(k1, (2, 4, 16, 16), dtype=jnp.float32)
    targets = jax.random.randint(k2, (2, 16, 16), 0, 4, dtype=jnp.int32)
    check("basic", preds, targets)

    # 2) Multi-tile accumulation + ragged edge tile + 2-way HW split (odd
    #    batch) + clamped duplicate edge block, forced via a tiny VMEM budget.
    preds2 = jax.random.normal(k3, (1, 3, 80, 64), dtype=jnp.float32)
    targets2 = jax.random.randint(k4, (1, 80, 64), 0, 3, dtype=jnp.int32)
    check("tiled_split", preds2, targets2, vmem_budget_bytes=115_000)

    # 3) H*W not a multiple of 128 (lane-remainder pad only) + 1-byte labels.
    preds3 = jax.random.normal(k5, (2, 5, 36, 36), dtype=jnp.float32)
    targets3 = jax.random.randint(k6, (2, 36, 36), 0, 5, dtype=jnp.int32)
    check("lane_pad_int8", preds3, targets3.astype(jnp.int8))

    print("KERNEL_OK")
</pallas_src>

<mosaic_0001>
module attributes {stable_mosaic.version = 11 : i64} {
  func.func @_tversky_partial_kernel(%arg0: i32, %arg1: i32, %arg2: i32, %arg3: memref<1x4x2x128xf32, #tpu.memory_space<vmem>>, %arg4: memref<1x1x2x128xi32, #tpu.memory_space<vmem>>, %arg5: memref<1x1x2xf32, #tpu.memory_space<smem>>, %arg6: memref<2x2x128xf32, #tpu.memory_space<vmem>>) attributes {dimension_semantics = [#tpu.dimension_semantics<parallel>, #tpu.dimension_semantics<parallel>, #tpu.dimension_semantics<arbitrary>], iteration_bounds = array<i64: 2, 1, 1>, scalar_prefetch = 0 : i64, scratch_operands = 1 : i64, tpu.core_type = #tpu.core_type<tc>, window_params = [{transform_indices = @transform_0, window_bounds = array<i64: 1, 4, 2, 128>}, {transform_indices = @transform_1, window_bounds = array<i64: 1, 1, 2, 128>}, {transform_indices = @transform_2, window_bounds = array<i64: 1, 1, 2>}]} {
    %c0_i32 = arith.constant 0 : i32
    %0 = arith.cmpi eq, %arg2, %c0_i32 : i32
    %1 = arith.extui %0 : i1 to i32
    %c0_i32_0 = arith.constant 0 : i32
    %2 = arith.cmpi ne, %1, %c0_i32_0 : i32
    scf.if %2 {
      %cst_26 = arith.constant 0.000000e+00 : f32
      %35 = vector.broadcast %cst_26 : f32 to vector<2x2x128xf32>
      %c0_27 = arith.constant 0 : index
      %c0_28 = arith.constant 0 : index
      %c0_29 = arith.constant 0 : index
      %36 = vector.load %arg6[%c0_27, %c0_28, %c0_29] : memref<2x2x128xf32, #tpu.memory_space<vmem>>, vector<2x2x128xf32>
      tpu.vector_store %arg6[%c0_27, %c0_28, %c0_29], %35 {strides = array<i32>} : memref<2x2x128xf32, #tpu.memory_space<vmem>>, vector<2x2x128xf32>,
    } else {
    }
    %c0 = arith.constant 0 : index
    %c0_1 = arith.constant 0 : index
    %c0_2 = arith.constant 0 : index
    %c0_3 = arith.constant 0 : index
    %3 = vector.load %arg3[%c0, %c0_1, %c0_2, %c0_3] : memref<1x4x2x128xf32, #tpu.memory_space<vmem>>, vector<1x4x2x128xf32>
    %cst = arith.constant 5.000000e-01 : f32
    %4 = vector.broadcast %cst : f32 to vector<1x4x2x128xf32>
    %5 = arith.mulf %4, %3 : vector<1x4x2x128xf32>
    %6 = math.tanh %5 : vector<1x4x2x128xf32>
    %cst_4 = arith.constant 5.000000e-01 : f32
    %7 = vector.broadcast %cst_4 : f32 to vector<1x4x2x128xf32>
    %8 = arith.mulf %7, %6 : vector<1x4x2x128xf32>
    %cst_5 = arith.constant 5.000000e-01 : f32
    %9 = vector.broadcast %cst_5 : f32 to vector<1x4x2x128xf32>
    %10 = arith.addf %8, %9 : vector<1x4x2x128xf32>
    %c0_6 = arith.constant 0 : index
    %c0_7 = arith.constant 0 : index
    %c0_8 = arith.constant 0 : index
    %c0_9 = arith.constant 0 : index
    %11 = vector.load %arg4[%c0_6, %c0_7, %c0_8, %c0_9] : memref<1x1x2x128xi32, #tpu.memory_space<vmem>>, vector<1x1x2x128xi32>
    %12 = tpu.iota {dimensions = array<i32: 1>} : vector<1x4x1x1xi32>
    %13 = vector.broadcast %11 : vector<1x1x2x128xi32> to vector<1x4x2x128xi32>
    %14 = vector.broadcast %12 : vector<1x4x1x1xi32> to vector<1x4x2x128xi32>
    %15 = arith.cmpi eq, %13, %14 : vector<1x4x2x128xi32>
    %cst_10 = arith.constant 0.000000e+00 : f32
    %16 = vector.broadcast %cst_10 : f32 to vector<1x4x2x128xf32>
    %17 = arith.select %15, %10, %16 : vector<1x4x2x128xi1>, vector<1x4x2x128xf32>
    %c0_11 = arith.constant 0 : index
    %c0_12 = arith.constant 0 : index
    %c0_13 = arith.constant 0 : index
    %18 = vector.load %arg6[%c0_11, %c0_12, %c0_13] : memref<2x2x128xf32, #tpu.memory_space<vmem>>, vector<1x2x128xf32>
    %19 = vector.shape_cast %18 : vector<1x2x128xf32> to vector<2x128xf32>
    %cst_14 = arith.constant dense<0.000000e+00> : vector<2x128xf32>
    %20 = vector.multi_reduction <add>, %17, %cst_14 [0, 1] : vector<1x4x2x128xf32> to vector<2x128xf32>
    %21 = arith.addf %19, %20 : vector<2x128xf32>
    %c0_15 = arith.constant 0 : index
    %c0_16 = arith.constant 0 : index
    %c0_17 = arith.constant 0 : index
    %22 = vector.load %arg6[%c0_15, %c0_16, %c0_17] : memref<2x2x128xf32, #tpu.memory_space<vmem>>, vector<1x2x128xf32>
    %23 = vector.shape_cast %22 : vector<1x2x128xf32> to vector<2x128xf32>
    %24 = vector.shape_cast %21 : vector<2x128xf32> to vector<1x2x128xf32>
    tpu.vector_store %arg6[%c0_15, %c0_16, %c0_17], %24 {strides = array<i32>} : memref<2x2x128xf32, #tpu.memory_space<vmem>>, vector<1x2x128xf32>,
    %c1 = arith.constant 1 : index
    %c0_18 = arith.constant 0 : index
    %c0_19 = arith.constant 0 : index
    %25 = vector.load %arg6[%c1, %c0_18, %c0_19] : memref<2x2x128xf32, #tpu.memory_space<vmem>>, vector<1x2x128xf32>
    %26 = vector.shape_cast %25 : vector<1x2x128xf32> to vector<2x128xf32>
    %cst_20 = arith.constant dense<0.000000e+00> : vector<2x128xf32>
    %27 = vector.multi_reduction <add>, %10, %cst_20 [0, 1] : vector<1x4x2x128xf32> to vector<2x128xf32>
    %28 = arith.addf %26, %27 : vector<2x128xf32>
    %c1_21 = arith.constant 1 : index
    %c0_22 = arith.constant 0 : index
    %c0_23 = arith.constant 0 : index
    %29 = vector.load %arg6[%c1_21, %c0_22, %c0_23] : memref<2x2x128xf32, #tpu.memory_space<vmem>>, vector<1x2x128xf32>
    %30 = vector.shape_cast %29 : vector<1x2x128xf32> to vector<2x128xf32>
    %31 = vector.shape_cast %28 : vector<2x128xf32> to vector<1x2x128xf32>
    tpu.vector_store %arg6[%c1_21, %c0_22, %c0_23], %31 {strides = array<i32>} : memref<2x2x128xf32, #tpu.memory_space<vmem>>, vector<1x2x128xf32>,
    %c0_i32_24 = arith.constant 0 : i32
    %32 = arith.cmpi eq, %arg2, %c0_i32_24 : i32
    %33 = arith.extui %32 : i1 to i32
    %c0_i32_25 = arith.constant 0 : i32
    %34 = arith.cmpi ne, %33, %c0_i32_25 : i32
    scf.if %34 {
      %c0_26 = arith.constant 0 : index
      %c0_27 = arith.constant 0 : index
      %c0_28 = arith.constant 0 : index
      %35 = vector.load %arg6[%c0_26, %c0_27, %c0_28] : memref<2x2x128xf32, #tpu.memory_space<vmem>>, vector<1x2x128xf32>
      %36 = vector.shape_cast %35 : vector<1x2x128xf32> to vector<2x128xf32>
      %37 = vector.shape_cast %36 : vector<2x128xf32> to vector<1x2x128xf32>
      %cst_29 = arith.constant dense<0.000000e+00> : vector<1xf32>
      %38 = vector.multi_reduction <add>, %37, %cst_29 [1, 2] : vector<1x2x128xf32> to vector<1xf32>
      %39 = vector.shape_cast %38 : vector<1xf32> to vector<1x1x1xf32>
      %40 = vector.extract %39[0, 0, 0] : f32 from vector<1x1x1xf32>
      %c0_30 = arith.constant 0 : index
      %c0_31 = arith.constant 0 : index
      %c0_32 = arith.constant 0 : index
      %41 = memref.load %arg5[%c0_30, %c0_31, %c0_32] : memref<1x1x2xf32, #tpu.memory_space<smem>>
      memref.store %40, %arg5[%c0_30, %c0_31, %c0_32] : memref<1x1x2xf32, #tpu.memory_space<smem>>
      %c1_33 = arith.constant 1 : index
      %c0_34 = arith.constant 0 : index
      %c0_35 = arith.constant 0 : index
      %42 = vector.load %arg6[%c1_33, %c0_34, %c0_35] : memref<2x2x128xf32, #tpu.memory_space<vmem>>, vector<1x2x128xf32>
      %43 = vector.shape_cast %42 : vector<1x2x128xf32> to vector<2x128xf32>
      %44 = vector.shape_cast %43 : vector<2x128xf32> to vector<1x2x128xf32>
      %cst_36 = arith.constant dense<0.000000e+00> : vector<1xf32>
      %45 = vector.multi_reduction <add>, %44, %cst_36 [1, 2] : vector<1x2x128xf32> to vector<1xf32>
      %46 = vector.shape_cast %45 : vector<1xf32> to vector<1x1x1xf32>
      %47 = vector.extract %46[0, 0, 0] : f32 from vector<1x1x1xf32>
      %c0_37 = arith.constant 0 : index
      %c0_38 = arith.constant 0 : index
      %c1_39 = arith.constant 1 : index
      %48 = memref.load %arg5[%c0_37, %c0_38, %c1_39] : memref<1x1x2xf32, #tpu.memory_space<smem>>
      memref.store %47, %arg5[%c0_37, %c0_38, %c1_39] : memref<1x1x2xf32, #tpu.memory_space<smem>>
    } else {
    }
    return
  }
  func.func @transform_0(%arg0: i32, %arg1: i32, %arg2: i32) -> (i32, i32, i32, i32) {
    %c1_i32 = arith.constant 1 : i32
    %0 = arith.muli %arg1, %c1_i32 : i32
    %1 = arith.addi %0, %arg2 : i32
    %c0_i32 = arith.constant 0 : i32
    %c0_i32_0 = arith.constant 0 : i32
    %c0_i32_1 = arith.constant 0 : i32
    return %arg0, %c0_i32, %1, %c0_i32_0 : i32, i32, i32, i32
  }
  func.func @transform_1(%arg0: i32, %arg1: i32, %arg2: i32) -> (i32, i32, i32, i32) {
    %c1_i32 = arith.constant 1 : i32
    %0 = arith.muli %arg1, %c1_i32 : i32
    %1 = arith.addi %0, %arg2 : i32
    %c0_i32 = arith.constant 0 : i32
    %c0_i32_0 = arith.constant 0 : i32
    %c0_i32_1 = arith.constant 0 : i32
    return %arg0, %c0_i32, %1, %c0_i32_0 : i32, i32, i32, i32
  }
  func.func @transform_2(%arg0: i32, %arg1: i32, %arg2: i32) -> (i32, i32, i32) {
    %c0_i32 = arith.constant 0 : i32
    %c0_i32_0 = arith.constant 0 : i32
    return %arg0, %arg1, %c0_i32 : i32, i32, i32
  }
}

</mosaic_0001>

<llo_original>
// kernel: tpu_custom_call.1
$region0: #{tpu_custom_call.1}
  #allocation0 [shape = 'u32[]', space=smem, size = 0x4, offset = 0x4, fixed_abs, tag = 'smem constant byte address 0x4 - core index']
  #allocation1 [shape = 'u32[144,128]{1,0:T(1,128)}', space=vmem, size = 0x12000, scoped, tag = 'internal scratch']
  #allocation2 [shape = 'f32[2,2,128]{2,1,0:T(2,128)}', space=vmem, size = 0x800, scoped, tag = 'scratch operand']
  %s0 = inlined_call_operand.hbm [shape: f32[2,4,2,128], index: 0, kind: input, shape index: {}]
  %s1 = inlined_call_operand.hbm [shape: s32[2,1,2,128], index: 1, kind: input, shape index: {}]
  %s2 = inlined_call_operand.hbm [shape: f32[2,1,2], index: 2, kind: output, shape index: {}]
  %s3 = sld [smem:[#allocation0]]
  $region57: #{tpu_custom_call.1} parent=0
    _
  %s5 = ssub.s32 1, %s3
  %s6 = scalar_select 0, %s5, %s3
  $region1: #{tpu_custom_call.1} parent=0
    #allocation3 [shape = 'u8[8192]{0}', space=vmem, size = 0x2000, scoped, tag = 'input window, operand 0']
    #allocation4 [shape = 's32[2]{0}', space=sflag, size = 0x8, scoped, tag = 'scoped memory for tpu_custom_call.1']
    #allocation5 [shape = 's32[2]{0}', space=sflag, size = 0x8, scoped, tag = 'scoped memory for tpu_custom_call.1']
    #allocation6 [shape = 'u8[2048]{0}', space=vmem, size = 0x800, scoped, tag = 'input window, operand 1']
    #allocation7 [shape = 's32[2]{0}', space=sflag, size = 0x8, scoped, tag = 'scoped memory for tpu_custom_call.1']
    #allocation8 [shape = 'u8[1024]{0}', space=smem, size = 0x400, scoped, tag = 'output window, operand 0']
    %7 = vsyncpa [#allocation4], 0
    %s8 = scalar_lea.sflag [#allocation4], 1
    %9 = vsyncpa %s8, 0
    %10 = vsyncpa [#allocation7], 0
    %s11 = scalar_lea.sflag [#allocation7], 1
    %12 = vsyncpa %s11, 0
    %13 = vsyncpa [#allocation5], 0
    %s14 = scalar_lea.sflag [#allocation5], 1
    %15 = vsyncpa %s14, 0
    loop: start=0, step=1, limit=4
    $region2: #{tpu_custom_call.1} parent=1 // loop_pre_header
      _
    $region3: #{tpu_custom_call.1} parent=1 // loop_header
      %s17 = sphi 0, %s21
      %p18 = scmp.ge.s32.totalorder %s17, 4
      %s24 = sphi 0, %s43
      %s25 = sphi 0, %s39
      %s26 = sphi 0, %s35
      %s27 = sphi 0, %s24
      %s28 = sphi 0, %s25
      %s29 = sphi 0, %s26
      %s30 = sphi 0, %s27
      %s31 = sphi 0, %s28
      %s32 = sphi 0, %s29
      %s50 = sphi 0, %s52
      %s53 = sphi 0, %s50
      %s54 = sphi 0, %s53
      %s70 = sphi 0, %s54
      %s80 = sphi 0, %s82
      %s83 = sphi 0, %s80
      %s84 = sphi 0, %s83
      %s100 = sphi 0, %s84
      %s108 = sphi 0, %s110
      %s111 = sphi 0, %s108
      %s112 = sphi 0, %s111
      %s128 = sphi 0, %s112
    $region4: #{tpu_custom_call.1} parent=1 // loop_header_branch
      %20 = sbr.rel (%p18) target = $region8
    $region5: #{tpu_custom_call.1} parent=1 // loop_body
      %s22 = ssub.s32 %s17, 1
      %s23 = ssub.s32 %s17, 2
      %s33 = sadd.s32 1, %s26
      %p34 = scmp.ge.s32.totalorder %s33, 1
      %s35 = scalar_select %p34, 0, %s33
      %s36 = sadd.s32 1, %s25
      %s37 = scalar_select %p34, %s36, %s25
      %p38 = scmp.ge.s32.totalorder %s37, 1
      %s39 = scalar_select %p38, 0, %s37
      %s40 = sadd.s32 1, %s24
      %s41 = scalar_select %p38, %s40, %s24
      %p42 = scmp.ge.s32.totalorder %s41, 2
      %s43 = scalar_select %p42, 0, %s41
      %s44 = sadd.s32 %s25, %s26
      %s45 = sadd.s32 %s39, %s35
      %s46 = ssub.s32 %s24, %s43
      %s47 = ssub.s32 %s44, %s45
      %s48 = sor.u32 %s46, %s47
      %p49 = scmp.eq.s32.totalorder %s48, 0
      %s51 = sadd.s32 %s50, 1
      %s52 = scalar_select %p49, %s50, %s51
      %p55 = pneg %p49
      %p56 = scmp.eq.s32.totalorder %s17, 1
      %p57 = por %p55, %p56
      %p58 = scmp.ne.s32.totalorder %s50, %s53
      %p59 = scmp.eq.s32.totalorder %s17, 0
      %p60 = por %p58, %p59
      %p61 = scmp.ne.s32.totalorder %s50, %s53
      %p62 = scmp.eq.s32.totalorder %s22, 1
      %p63 = por %p61, %p62
      %p64 = scmp.ne.s32.totalorder %s53, %s54
      %p65 = scmp.eq.s32.totalorder %s22, 0
      %p66 = por %p64, %p65
      %p67 = scmp.ne.s32.totalorder %s53, %s54
      %p68 = scmp.eq.s32.totalorder %s23, 1
      %p69 = por %p67, %p68
      %p71 = scmp.ne.s32.totalorder %s54, %s70
      %p72 = scmp.eq.s32.totalorder %s23, 0
      %p73 = por %p71, %p72
      %s74 = sadd.s32 %s25, %s26
      %s75 = sadd.s32 %s39, %s35
      %s76 = ssub.s32 %s24, %s43
      %s77 = ssub.s32 %s74, %s75
      %s78 = sor.u32 %s76, %s77
      %p79 = scmp.eq.s32.totalorder %s78, 0
      %s81 = sadd.s32 %s80, 1
      %s82 = scalar_select %p79, %s80, %s81
      %p85 = pneg %p79
      %p86 = scmp.eq.s32.totalorder %s17, 1
      %p87 = por %p85, %p86
      %p88 = scmp.ne.s32.totalorder %s80, %s83
      %p89 = scmp.eq.s32.totalorder %s17, 0
      %p90 = por %p88, %p89
      %p91 = scmp.ne.s32.totalorder %s80, %s83
      %p92 = scmp.eq.s32.totalorder %s22, 1
      %p93 = por %p91, %p92
      %p94 = scmp.ne.s32.totalorder %s83, %s84
      %p95 = scmp.eq.s32.totalorder %s22, 0
      %p96 = por %p94, %p95
      %p97 = scmp.ne.s32.totalorder %s83, %s84
      %p98 = scmp.eq.s32.totalorder %s23, 1
      %p99 = por %p97, %p98
      %p101 = scmp.ne.s32.totalorder %s84, %s100
      %p102 = scmp.eq.s32.totalorder %s23, 0
      %p103 = por %p101, %p102
      %s104 = ssub.s32 %s24, %s43
      %s105 = ssub.s32 %s25, %s39
      %s106 = sor.u32 %s104, %s105
      %p107 = scmp.eq.s32.totalorder %s106, 0
      %s109 = sadd.s32 %s108, 1
      %s110 = scalar_select %p107, %s108, %s109
      %p113 = pneg %p107
      %p114 = scmp.eq.s32.totalorder %s17, 1
      %p115 = por %p113, %p114
      %p116 = scmp.ne.s32.totalorder %s108, %s111
      %p117 = scmp.eq.s32.totalorder %s17, 0
      %p118 = por %p116, %p117
      %p119 = scmp.ne.s32.totalorder %s108, %s111
      %p120 = scmp.eq.s32.totalorder %s22, 1
      %p121 = por %p119, %p120
      %p122 = scmp.ne.s32.totalorder %s111, %s112
      %p123 = scmp.eq.s32.totalorder %s22, 0
      %p124 = por %p122, %p123
      %p125 = scmp.ne.s32.totalorder %s111, %s112
      %p126 = scmp.eq.s32.totalorder %s23, 1
      %p127 = por %p125, %p126
      %p129 = scmp.ne.s32.totalorder %s112, %s128
      %p130 = scmp.eq.s32.totalorder %s23, 0
      %p131 = por %p129, %p130
      %p132 = scmp.le.s32.totalorder 1, %s17
      %p133 = scmp.lt.s32.totalorder %s17, 3
      %p134 = pnand %p132, %p133
      %p135 = pneg %p134
      // Predicated region
      $region9: #{tpu_custom_call.1} parent=5 // pred_check
        _
      $region10: #{tpu_custom_call.1} parent=5 // pred_check_branch
        %137 = sbr.rel (%p134) target = $region12
      $region11: #{tpu_custom_call.1} parent=5 // pred_region
        %s138 = ssub.s32 %s17, 1
      $region12: #{tpu_custom_call.1} parent=5 // pred_fallthru
        _
      %p139 = scmp.lt.s32.totalorder %s17, 2
      // Predicated region
      $region13: #{tpu_custom_call.1} parent=5 // pred_check
        %p140 = pneg %p139
      $region14: #{tpu_custom_call.1} parent=5 // pred_check_branch
        %142 = sbr.rel (%p140) target = $region16
      $region15: #{tpu_custom_call.1} parent=5 // pred_region
        // Predicated region
        $region17: #{tpu_custom_call.1} parent=15 // pred_check
          %p143 = pneg %p60
        $region18: #{tpu_custom_call.1} parent=15 // pred_check_branch
          %145 = sbr.rel (%p143) target = $region20
        $region19: #{tpu_custom_call.1} parent=15 // pred_region
          %s146 = sand.u32 %s50, 1
          %s147 = scalar_lea.sflag [#allocation4], %s146
          %s148 = sand.u32 %s50, 1
          %s149 = smul.addr %s148, 8
          %s150 = scalar_lea.vmem [#allocation3], %s149
          %s151 = sadd.s32 %s25, %s26
          %s153 = ssub.s32 128, 128
          %154 = vsyncadd %s147, %s153
          %s155 = smul.addr %s24, 4
          %s156 = sadd.s32 %s151, %s155
          %s157 = smul.addr %s156, 32
          %s158 = scalar_lea.hbm %s0, %s157
          %s159 = sshll.u32 %s150, 4
          %s160 = int_to_ptr.vmem [resolvable:$true] %s159
          %165 = dma.hbm_to_vmem [thread:$0]  %s158, 128, %s160, %s147, 32, 32, 2
        $region20: #{tpu_custom_call.1} parent=15 // pred_fallthru
          _
        // Predicated region
        $region21: #{tpu_custom_call.1} parent=15 // pred_check
          %p166 = pneg %p90
        $region22: #{tpu_custom_call.1} parent=15 // pred_check_branch
          %168 = sbr.rel (%p166) target = $region24
        $region23: #{tpu_custom_call.1} parent=15 // pred_region
          %s169 = sand.u32 %s80, 1
          %s170 = scalar_lea.sflag [#allocation7], %s169
          %s171 = sand.u32 %s80, 1
          %s172 = smul.addr %s171, 2
          %s173 = scalar_lea.vmem [#allocation6], %s172
          %s174 = sadd.s32 %s25, %s26
          %s176 = ssub.s32 32, 32
          %177 = vsyncadd %s170, %s176
          %s178 = sadd.s32 %s174, %s24
          %s179 = smul.addr %s178, 32
          %s180 = scalar_lea.hbm %s1, %s179
          %s182 = sshll.u32 %s173, 4
          %s183 = int_to_ptr.vmem [resolvable:$true] %s182
          %185 = dma.hbm_to_vmem [thread:$0]  %s180, 32, %s183, %s170
        $region24: #{tpu_custom_call.1} parent=15 // pred_fallthru
          _
      $region16: #{tpu_custom_call.1} parent=5 // pred_fallthru
        _
      %p186 = scmp.le.s32.totalorder 1, %s17
      %p187 = scmp.lt.s32.totalorder %s17, 3
      %p188 = pnand %p186, %p187
      %p189 = pneg %p188
      // Predicated region
      $region25: #{tpu_custom_call.1} parent=5 // pred_check
        _
      $region26: #{tpu_custom_call.1} parent=5 // pred_check_branch
        %191 = sbr.rel (%p188) target = $region28
      $region27: #{tpu_custom_call.1} parent=5 // pred_region
        %s192 = ssub.s32 %s17, 1
        %s193 = sand.u32 %s53, 1
        %s194 = scalar_lea.sflag [#allocation4], %s193
        %s195 = sand.u32 %s53, 1
        %s196 = smul.addr %s195, 8
        %s197 = scalar_lea.vmem [#allocation3], %s196
        // Predicated region
        $region29: #{tpu_custom_call.1} parent=27 // pred_check
          %p198 = pneg %p66
        $region30: #{tpu_custom_call.1} parent=27 // pred_check_branch
          %200 = sbr.rel (%p198) target = $region32
        $region31: #{tpu_custom_call.1} parent=27 // pred_region
          %201 = dma.done %s194, 128
        $region32: #{tpu_custom_call.1} parent=27 // pred_fallthru
          _
        %s202 = sand.u32 %s83, 1
        %s203 = scalar_lea.sflag [#allocation7], %s202
        %s204 = sand.u32 %s83, 1
        %s205 = smul.addr %s204, 2
        %s206 = scalar_lea.vmem [#allocation6], %s205
        // Predicated region
        $region33: #{tpu_custom_call.1} parent=27 // pred_check
          %p207 = pneg %p96
        $region34: #{tpu_custom_call.1} parent=27 // pred_check_branch
          %209 = sbr.rel (%p207) target = $region36
        $region35: #{tpu_custom_call.1} parent=27 // pred_region
          %210 = dma.done %s203, 32
        $region36: #{tpu_custom_call.1} parent=27 // pred_fallthru
          _
        %s211 = sand.u32 %s53, 1
        %s212 = scalar_lea.sflag [#allocation4], %s211
        %s213 = sand.u32 %s53, 1
        %s214 = smul.addr %s213, 8
        %s215 = scalar_lea.vmem [#allocation3], %s214
        %p216 = pneg %p66
        %p217 = pneg %p63
        %s218 = sand.u32 %s83, 1
        %s219 = scalar_lea.sflag [#allocation7], %s218
        %s220 = sand.u32 %s83, 1
        %s221 = smul.addr %s220, 2
        %s222 = scalar_lea.vmem [#allocation6], %s221
        %p223 = pneg %p96
        %p224 = pneg %p93
        %p225 = pneg %p124
        %p226 = pneg %p121
        %s227 = sand.u32 %s111, 1
        %s228 = scalar_lea.sflag [#allocation5], %s227
        %s229 = sand.u32 %s111, 1
        %s230 = smul.addr %s229, 128
        %s231 = scalar_lea.smem [#allocation8], %s230
        %s232 = sadd.s32 %s28, %s29
        %s233 = sadd.s32 %s28, %s29
        %p234 = scmp.eq.s32.totalorder %s29, 0
        // Predicated region
        $region37: #{tpu_custom_call.1} parent=27 // pred_check
          %p235 = pneg %p234
        $region38: #{tpu_custom_call.1} parent=27 // pred_check_branch
          %237 = sbr.rel (%p235) target = $region40
        $region39: #{tpu_custom_call.1} parent=27 // pred_region
          %238 = vst [vmem:[#allocation2] sm:$0x3] 0.0
          %239 = vst [vmem:[#allocation2 + $0x2] sm:$0x3] 0.0
        $region40: #{tpu_custom_call.1} parent=27 // pred_fallthru
          _
        %v240 = vld [vmem:[%s197] sm:$0x3]
        %v241 = vld [vmem:[%s197 + $0x2] sm:$0x3]
        %v242 = vld [vmem:[%s197 + $0x4] sm:$0x3]
        %v243 = vld [vmem:[%s197 + $0x6] sm:$0x3]
        %v244 = vmul.f32 %v240, 0.5
        %v245 = vmul.f32 %v241, 0.5
        %v246 = vmul.f32 %v242, 0.5
        %v247 = vmul.f32 %v243, 0.5
        %v248 = vtanh.pop %v244
        %v249 = vtanh.pop %v245
        %v250 = vtanh.pop %v246
        %v251 = vtanh.pop %v247
        %v252 = vmul.f32 %v248, 0.5
        %v253 = vmul.f32 %v249, 0.5
        %v254 = vmul.f32 %v250, 0.5
        %v255 = vmul.f32 %v251, 0.5
        %v256 = vadd.f32 %v252, 0.5
        %v257 = vadd.f32 %v253, 0.5
        %v258 = vadd.f32 %v254, 0.5
        %v259 = vadd.f32 %v255, 0.5
        %v260 = vld [vmem:[%s206] sm:$0x3]
        %vm261 = vcmp.eq.s32.totalorder %v260, 0
        %vm262 = vcmp.eq.s32.totalorder %v260, 1
        %vm263 = vcmp.eq.s32.totalorder %v260, 2
        %vm264 = vcmp.eq.s32.totalorder %v260, 3
        %v265 = vsel %vm261, %v256, 0.0
        %v266 = vsel %vm262, %v257, 0.0
        %v267 = vsel %vm263, %v258, 0.0
        %v268 = vsel %vm264, %v259, 0.0
        %v269 = vld [vmem:[#allocation2] sm:$0x3]
        %vm270 = vcmask 1041408
        %v271 = vsel %vm270, %v265, 0.0
        %v272 = vsel %vm270, %v266, 0.0
        %v273 = vadd.f32 %v271, %v272
        %v274 = vsel %vm270, %v267, 0.0
        %v275 = vadd.f32 %v273, %v274
        %v276 = vsel %vm270, %v268, 0.0
        %v277 = vadd.f32 %v275, %v276
        %v278 = vadd.f32 %v269, %v277
        %279 = vst [vmem:[#allocation2] sm:$0x3] %v278
        %s280 = scalar_lea.vmem [#allocation2], 2
        %v281 = vld [vmem:[%s280] sm:$0x3]
        %v282 = vsel %vm270, %v256, 0.0
        %v283 = vsel %vm270, %v257, 0.0
        %v284 = vadd.f32 %v282, %v283
        %v285 = vsel %vm270, %v258, 0.0
        %v286 = vadd.f32 %v284, %v285
        %v287 = vsel %vm270, %v259, 0.0
        %v288 = vadd.f32 %v286, %v287
        %v289 = vadd.f32 %v281, %v288
        %290 = vst [vmem:[%s280] sm:$0x3] %v289
        // Predicated region
        $region41: #{tpu_custom_call.1} parent=27 // pred_check
          %p291 = pneg %p234
        $region42: #{tpu_custom_call.1} parent=27 // pred_check_branch
          %293 = sbr.rel (%p291) target = $region44
        $region43: #{tpu_custom_call.1} parent=27 // pred_region
          %v294 = vld [vmem:[#allocation2] sm:$0x3]
          %v295 = vsel %vm270, %v294, 0.0
          %296 = vadd.xlane.f32.xlu0 %v295
          %v297 = vpop.xlane.xlu0 %296
          %v298 = vrot.slane %v297, 4
          %v299 = vadd.f32 %v297, %v298
          %v300 = vrot.slane %v299, 2
          %v301 = vadd.f32 %v299, %v300
          %v302 = vrot.slane %v301, 1
          %v303 = vadd.f32 %v301, %v302
          %s304 = vtos %v303
          %s305 = scalar_lea.smem %s231, 0 [#allocation8]
          %306 = sst [smem:[%s305]] %s304
          %v307 = vld [vmem:[%s280] sm:$0x3]
          %v308 = vsel %vm270, %v307, 0.0
          %309 = vadd.xlane.f32.xlu0 %v308
          %v310 = vpop.xlane.xlu0 %309
          %v311 = vrot.slane %v310, 4
          %v312 = vadd.f32 %v310, %v311
          %v313 = vrot.slane %v312, 2
          %v314 = vadd.f32 %v312, %v313
          %v315 = vrot.slane %v314, 1
          %v316 = vadd.f32 %v314, %v315
          %s317 = vtos %v316
          %s318 = scalar_lea.smem %s231, 1 [#allocation8]
          %319 = sst [smem:[%s318]] %s317
        $region44: #{tpu_custom_call.1} parent=27 // pred_fallthru
          _
        %s320 = sand.u32 %s111, 1
        %s321 = scalar_lea.sflag [#allocation5], %s320
        %s322 = sand.u32 %s111, 1
        %s323 = smul.addr %s322, 128
        %s324 = scalar_lea.smem [#allocation8], %s323
        // Predicated region
        $region45: #{tpu_custom_call.1} parent=27 // pred_check
          %p325 = pneg %p121
        $region46: #{tpu_custom_call.1} parent=27 // pred_check_branch
          %327 = sbr.rel (%p325) target = $region48
        $region47: #{tpu_custom_call.1} parent=27 // pred_region
          %s329 = ssub.s32 16, 16
          %330 = vsyncadd %s321, %s329
          %s331 = sadd.s32 %s28, %s27
          %s332 = smul.addr %s331, 16
          %s333 = scalar_lea.hbm %s2, %s332
          %336 = dma.smem_to_hbm %s324, 16, %s333, %s321
        $region48: #{tpu_custom_call.1} parent=27 // pred_fallthru
          _
      $region28: #{tpu_custom_call.1} parent=5 // pred_fallthru
        _
      %p337 = scmp.le.s32.totalorder 2, %s17
      // Predicated region
      $region49: #{tpu_custom_call.1} parent=5 // pred_check
        %p338 = pneg %p337
      $region50: #{tpu_custom_call.1} parent=5 // pred_check_branch
        %340 = sbr.rel (%p338) target = $region52
      $region51: #{tpu_custom_call.1} parent=5 // pred_region
        %s341 = ssub.s32 %s17, 2
        // Predicated region
        $region53: #{tpu_custom_call.1} parent=51 // pred_check
          %p342 = pneg %p127
        $region54: #{tpu_custom_call.1} parent=51 // pred_check_branch
          %344 = sbr.rel (%p342) target = $region56
        $region55: #{tpu_custom_call.1} parent=51 // pred_region
          %s345 = sand.u32 %s112, 1
          %s346 = scalar_lea.sflag [#allocation5], %s345
          %s347 = sand.u32 %s112, 1
          %s348 = smul.addr %s347, 128
          %s349 = scalar_lea.smem [#allocation8], %s348
          %350 = dma.done %s346, 16
        $region56: #{tpu_custom_call.1} parent=51 // pred_fallthru
          _
        %351 = sfence
      $region52: #{tpu_custom_call.1} parent=5 // pred_fallthru
        _
    $region6: #{tpu_custom_call.1} parent=1 // loop_footer
      %s21 = sadd.s32 1, %s17
    $region7: #{tpu_custom_call.1} parent=1 // loop_footer_branch
      %16 = sbr.rel target = $region3
    $region8: #{tpu_custom_call.1} parent=1 // loop_exit
      _
    %352 = vsyncpa [#allocation4], 1
    %s353 = scalar_lea.sflag [#allocation4], 1
    %354 = vsyncpa %s353, 1
    %355 = vsyncpa [#allocation7], 1
    %s356 = scalar_lea.sflag [#allocation7], 1
    %357 = vsyncpa %s356, 1
    %358 = vsyncpa [#allocation5], 1
    %s359 = scalar_lea.sflag [#allocation5], 1
    %360 = vsyncpa %s359, 1

</llo_original>
